<compile_context>
chip_gen: v6e
topology: v6e:2x2x1
jax: 0.10.0
libtpu: 0.0.40
codegen_flags: <defaults>
</compile_context>

<pallas_src>
import functools

import jax
import jax.numpy as jnp
from jax.experimental import pallas as pl
from jax.experimental.pallas import tpu as pltpu


def dueling_mlp_kernel(x_ref, w1_ref, b1_ref, wa2_ref, ba2_ref,
                       wv2_ref, bv2_ref, q_ref, *, hidden_dim, action_dim):
    x = x_ref[...]                                             # (bm, input_dim)

    # Fused layer 1: one MXU pass for both heads, width = 2 * hidden_dim.
    # bf16 or f32 inputs, always f32 accumulation; bias/ReLU in f32.
    h = jnp.dot(x, w1_ref[...], preferred_element_type=jnp.float32) + b1_ref[...]
    h = jnp.maximum(h, 0.0)                                    # (bm, 2H) f32
    ha = h[:, :hidden_dim]                                     # advantage hidden
    hv = h[:, hidden_dim:]                                     # value hidden

    # Advantage head layer 2 (MXU, lane-dense padded width A_pad >= 128).
    a = jnp.dot(ha.astype(wa2_ref.dtype), wa2_ref[...],
                preferred_element_type=jnp.float32) + ba2_ref[...]

    # Value head layer 2: N=1 "matmul" done on VPU (mul) + XLU (row reduce).
    v = jnp.sum(hv * wv2_ref[...], axis=-1, keepdims=True) + bv2_ref[...]

    # Dueling combine: q = v + a - mean(a, dim=1, keepdim=True).
    # Padded columns of `a` are exactly zero, so summing over the full padded
    # width equals the sum over the real columns; divide by the REAL width.
    a_mean = jnp.sum(a, axis=-1, keepdims=True) * (1.0 / action_dim)
    q_ref[...] = (v + a - a_mean).astype(q_ref.dtype)


def _tensorcores_per_chip():
    """2 on v7x, 1 on v5e/v6e (best-effort; default 1 on failure)."""
    try:
        kind = (getattr(jax.devices()[0], "device_kind", "") or "").lower()
        if "v7" in kind:
            return 2
    except Exception:
        pass
    return 1


def _round_up(n, m):
    return ((n + m - 1) // m) * m


def _pick_bm(B, bm_cap, num_cores):
    """Batch tile: multiple of 8 (or == B for one full block), <= B."""
    bm_cap = max(8, (bm_cap // 8) * 8)
    if B <= bm_cap:
        if num_cores >= 2 and B >= 16:
            # v7x: split small batches into exactly 2 steps so both TCs work.
            return min(B, _round_up((B + 1) // 2, 8))
        # Single-TC chips: one full block, zero extra per-step overhead.
        return B
    bm_eff = bm_cap
    if num_cores >= 2:
        steps = -(-B // bm_eff)
        if steps % 2 == 1:                     # balance the two TensorCores
            bm_eff = _round_up(-(-B // (steps + 1)), 8)
    return bm_eff


def dueling_mlp(x, params, *, bm=2048, use_bf16=False):
    """x: (B, input_dim) float32. params: weights in (in_features, out_features) layout."""
    B, input_dim = x.shape
    hidden_dim = params["wa1"].shape[1]
    action_dim = params["wa2"].shape[1]
    a_pad = _round_up(max(action_dim, 128), 128)   # lane-dense output width

    # Fuse layer-1 weights/biases of both heads: (in, 2H) and (1, 2H).
    w1 = jnp.concatenate([params["wa1"], params["wv1"]], axis=1)
    b1 = jnp.concatenate([params["ba1"], params["bv1"]], axis=1).astype(jnp.float32)
    # Zero-pad advantage layer-2 to lane-dense width (padded a-columns are 0).
    wa2 = jnp.pad(params["wa2"], ((0, 0), (0, a_pad - action_dim)))
    ba2 = jnp.pad(params["ba2"], ((0, 0), (0, a_pad - action_dim))).astype(jnp.float32)
    wv2_row = params["wv2"].reshape(1, hidden_dim).astype(jnp.float32)  # VPU path stays f32
    bv2 = params["bv2"].reshape(1, 1).astype(jnp.float32)

    mm_dtype = jnp.bfloat16 if use_bf16 else jnp.float32
    x_in = x.astype(mm_dtype)
    w1 = w1.astype(mm_dtype)
    wa2 = wa2.astype(mm_dtype)

    bm_eff = _pick_bm(B, bm, _tensorcores_per_chip())
    grid = (pl.cdiv(B, bm_eff),)

    itemsize = 2 if use_bf16 else 4
    cost = pl.CostEstimate(
        flops=(2 * B * input_dim * 2 * hidden_dim
               + 2 * B * hidden_dim * a_pad
               + 2 * B * hidden_dim
               + 5 * B * a_pad),
        transcendentals=0,
        bytes_accessed=(B * input_dim * itemsize
                        + (input_dim * 2 * hidden_dim + hidden_dim * a_pad) * itemsize
                        + (2 * hidden_dim + a_pad + hidden_dim + 1) * 4
                        + B * a_pad * 4),
    )

    const = lambda shape: pl.BlockSpec(shape, lambda i: (0, 0))

    q = pl.pallas_call(
        functools.partial(dueling_mlp_kernel,
                          hidden_dim=hidden_dim, action_dim=action_dim),
        out_shape=jax.ShapeDtypeStruct((B, a_pad), jnp.float32),
        grid_spec=pltpu.PrefetchScalarGridSpec(
            num_scalar_prefetch=0,
            grid=grid,
            in_specs=[
                pl.BlockSpec((bm_eff, input_dim), lambda i: (i, 0)),  # x tile
                const((input_dim, 2 * hidden_dim)),                   # fused w1
                const((1, 2 * hidden_dim)),                           # fused b1
                const((hidden_dim, a_pad)),                           # wa2 (padded)
                const((1, a_pad)),                                    # ba2 (padded)
                const((1, hidden_dim)),                               # wv2 as a row
                const((1, 1)),                                        # bv2
            ],
            out_specs=pl.BlockSpec((bm_eff, a_pad), lambda i: (i, 0)),
        ),
        compiler_params=pltpu.CompilerParams(
            dimension_semantics=("parallel",),
            vmem_limit_bytes=32 * 1024 * 1024),
        cost_estimate=cost,
    )(x_in, w1, b1, wa2, ba2, wv2_row, bv2)

    return q[:, :action_dim]


def init_params(key, input_dim, action_dim, hidden_dim):
    """Deterministic synthetic init; weights in (in_features, out_features) layout."""
    ks = jax.random.split(key, 8)
    s1 = 1.0 / jnp.sqrt(input_dim)
    s2 = 1.0 / jnp.sqrt(hidden_dim)
    u = lambda k, shape, s: jax.random.uniform(k, shape, jnp.float32, -s, s)
    return {
        "wa1": u(ks[0], (input_dim, hidden_dim), s1),
        "ba1": u(ks[1], (1, hidden_dim), s1),
        "wa2": u(ks[2], (hidden_dim, action_dim), s2),
        "ba2": u(ks[3], (1, action_dim), s2),
        "wv1": u(ks[4], (input_dim, hidden_dim), s1),
        "bv1": u(ks[5], (1, hidden_dim), s1),
        "wv2": u(ks[6], (hidden_dim, 1), s2),
        "bv2": u(ks[7], (1, 1), s2),
    }


def dueling_mlp_ref(x, p):
    """Pure-JAX reference matching the PyTorch forward."""
    ha = jnp.maximum(x @ p["wa1"] + p["ba1"], 0.0)
    a = ha @ p["wa2"] + p["ba2"]
    hv = jnp.maximum(x @ p["wv1"] + p["bv1"], 0.0)
    v = hv @ p["wv2"] + p["bv2"]
    return v + a - a.mean(axis=1, keepdims=True)


if __name__ == "__main__":
    B, INPUT_DIM, ACTION_DIM, HIDDEN_DIM = 64, 32, 8, 128

    key = jax.random.PRNGKey(0)
    kx, kp = jax.random.split(key)
    x = jax.random.normal(kx, (B, INPUT_DIM), jnp.float32)
    params = init_params(kp, INPUT_DIM, ACTION_DIM, HIDDEN_DIM)

    # f32 path (exact semantics of the PyTorch module).
    q = dueling_mlp(x, params)
    jax.block_until_ready(q)

    q_ref = dueling_mlp_ref(x, params)
    assert q.shape == (B, ACTION_DIM)
    assert jnp.allclose(q, q_ref, atol=1e-4, rtol=1e-4), "mismatch vs reference (f32)"

    # bf16 MXU-input path (precision trade-off; f32 accumulation and combine).
    q_bf16 = dueling_mlp(x, params, use_bf16=True)
    jax.block_until_ready(q_bf16)
    assert q_bf16.shape == (B, ACTION_DIM)
    assert jnp.allclose(q_bf16, q_ref, atol=1e-1, rtol=1e-1), "mismatch vs reference (bf16)"

    print("KERNEL_OK")
</pallas_src>

<mosaic_0001>
module attributes {stable_mosaic.version = 11 : i64} {
  func.func @dueling_mlp_kernel(%arg0: i32, %arg1: memref<64x32xf32, #tpu.memory_space<vmem>>, %arg2: memref<32x256xf32, #tpu.memory_space<vmem>>, %arg3: memref<1x256xf32, #tpu.memory_space<vmem>>, %arg4: memref<128x128xf32, #tpu.memory_space<vmem>>, %arg5: memref<1x128xf32, #tpu.memory_space<vmem>>, %arg6: memref<1x128xf32, #tpu.memory_space<vmem>>, %arg7: memref<1x1xf32, #tpu.memory_space<vmem>>, %arg8: memref<64x128xf32, #tpu.memory_space<vmem>>) attributes {dimension_semantics = [#tpu.dimension_semantics<parallel>], iteration_bounds = array<i64: 1>, scalar_prefetch = 0 : i64, scratch_operands = 0 : i64, tpu.core_type = #tpu.core_type<tc>, window_params = [{transform_indices = @transform_0, window_bounds = array<i64: 64, 32>}, {pipeline_mode = #tpu.pipeline_mode<synchronous>, transform_indices = @transform_1, window_bounds = array<i64: 32, 256>}, {pipeline_mode = #tpu.pipeline_mode<synchronous>, transform_indices = @transform_2, window_bounds = array<i64: 1, 256>}, {pipeline_mode = #tpu.pipeline_mode<synchronous>, transform_indices = @transform_3, window_bounds = array<i64: 128, 128>}, {pipeline_mode = #tpu.pipeline_mode<synchronous>, transform_indices = @transform_4, window_bounds = array<i64: 1, 128>}, {pipeline_mode = #tpu.pipeline_mode<synchronous>, transform_indices = @transform_5, window_bounds = array<i64: 1, 128>}, {pipeline_mode = #tpu.pipeline_mode<synchronous>, transform_indices = @transform_6, window_bounds = array<i64: 1, 1>}, {transform_indices = @transform_7, window_bounds = array<i64: 64, 128>}]} {
    %c0 = arith.constant 0 : index
    %c0_0 = arith.constant 0 : index
    %0 = vector.load %arg1[%c0, %c0_0] : memref<64x32xf32, #tpu.memory_space<vmem>>, vector<64x32xf32>
    %c0_1 = arith.constant 0 : index
    %c0_2 = arith.constant 0 : index
    %1 = vector.load %arg2[%c0_1, %c0_2] : memref<32x256xf32, #tpu.memory_space<vmem>>, vector<32x256xf32>
    %cst = arith.constant dense<0.000000e+00> : vector<64x256xf32>
    %2 = tpu.matmul %0, %1, %cst {dimension_numbers = #tpu.dot_dimension_numbers<[1], [0], [0], [1], [0, 0, 1, 1], [], []>} : vector<64x32xf32>, vector<32x256xf32>, vector<64x256xf32> -> vector<64x256xf32>
    %c0_3 = arith.constant 0 : index
    %c0_4 = arith.constant 0 : index
    %3 = vector.load %arg3[%c0_3, %c0_4] : memref<1x256xf32, #tpu.memory_space<vmem>>, vector<1x256xf32>
    %4 = vector.broadcast %3 : vector<1x256xf32> to vector<64x256xf32>
    %5 = arith.addf %2, %4 : vector<64x256xf32>
    %cst_5 = arith.constant 0.000000e+00 : f32
    %6 = vector.broadcast %cst_5 : f32 to vector<64x256xf32>
    %7 = arith.maximumf %5, %6 : vector<64x256xf32>
    %8 = vector.extract_strided_slice %7 {offsets = [0, 0], sizes = [64, 128], strides = [1, 1]} : vector<64x256xf32> to vector<64x128xf32>
    %9 = vector.extract_strided_slice %7 {offsets = [0, 128], sizes = [64, 128], strides = [1, 1]} : vector<64x256xf32> to vector<64x128xf32>
    %c0_6 = arith.constant 0 : index
    %c0_7 = arith.constant 0 : index
    %10 = vector.load %arg4[%c0_6, %c0_7] : memref<128x128xf32, #tpu.memory_space<vmem>>, vector<128x128xf32>
    %cst_8 = arith.constant dense<0.000000e+00> : vector<64x128xf32>
    %11 = tpu.matmul %8, %10, %cst_8 {dimension_numbers = #tpu.dot_dimension_numbers<[1], [0], [0], [1], [0, 0, 1, 1], [], []>} : vector<64x128xf32>, vector<128x128xf32>, vector<64x128xf32> -> vector<64x128xf32>
    %c0_9 = arith.constant 0 : index
    %c0_10 = arith.constant 0 : index
    %12 = vector.load %arg5[%c0_9, %c0_10] : memref<1x128xf32, #tpu.memory_space<vmem>>, vector<1x128xf32>
    %13 = vector.broadcast %12 : vector<1x128xf32> to vector<64x128xf32>
    %14 = arith.addf %11, %13 : vector<64x128xf32>
    %c0_11 = arith.constant 0 : index
    %c0_12 = arith.constant 0 : index
    %15 = vector.load %arg6[%c0_11, %c0_12] : memref<1x128xf32, #tpu.memory_space<vmem>>, vector<1x128xf32>
    %16 = vector.broadcast %15 : vector<1x128xf32> to vector<64x128xf32>
    %17 = arith.mulf %9, %16 : vector<64x128xf32>
    %cst_13 = arith.constant dense<0.000000e+00> : vector<64xf32>
    %18 = vector.multi_reduction <add>, %17, %cst_13 [1] : vector<64x128xf32> to vector<64xf32>
    %19 = vector.shape_cast %18 : vector<64xf32> to vector<64x1xf32>
    %c0_14 = arith.constant 0 : index
    %c0_15 = arith.constant 0 : index
    %20 = vector.load %arg7[%c0_14, %c0_15] : memref<1x1xf32, #tpu.memory_space<vmem>>, vector<1x1xf32>
    %21 = vector.broadcast %20 : vector<1x1xf32> to vector<64x1xf32>
    %22 = arith.addf %19, %21 : vector<64x1xf32>
    %cst_16 = arith.constant dense<0.000000e+00> : vector<64xf32>
    %23 = vector.multi_reduction <add>, %14, %cst_16 [1] : vector<64x128xf32> to vector<64xf32>
    %24 = vector.shape_cast %23 : vector<64xf32> to vector<64x1xf32>
    %cst_17 = arith.constant 1.250000e-01 : f32
    %25 = vector.broadcast %cst_17 : f32 to vector<64x1xf32>
    %26 = arith.mulf %24, %25 : vector<64x1xf32>
    %27 = vector.broadcast %22 : vector<64x1xf32> to vector<64x128xf32>
    %28 = arith.addf %27, %14 : vector<64x128xf32>
    %29 = vector.broadcast %26 : vector<64x1xf32> to vector<64x128xf32>
    %30 = arith.subf %28, %29 : vector<64x128xf32>
    %c0_18 = arith.constant 0 : index
    %c0_19 = arith.constant 0 : index
    %31 = vector.load %arg8[%c0_18, %c0_19] : memref<64x128xf32, #tpu.memory_space<vmem>>, vector<64x128xf32>
    tpu.vector_store %arg8[%c0_18, %c0_19], %30 {strides = array<i32>} : memref<64x128xf32, #tpu.memory_space<vmem>>, vector<64x128xf32>,
    return
  }
  func.func @transform_0(%arg0: i32) -> (i32, i32) {
    %c0_i32 = arith.constant 0 : i32
    %c0_i32_0 = arith.constant 0 : i32
    return %arg0, %c0_i32 : i32, i32
  }
  func.func @transform_1(%arg0: i32) -> (i32, i32) {
    %c0_i32 = arith.constant 0 : i32
    %c0_i32_0 = arith.constant 0 : i32
    %c0_i32_1 = arith.constant 0 : i32
    return %c0_i32, %c0_i32_0 : i32, i32
  }
  func.func @transform_2(%arg0: i32) -> (i32, i32) {
    %c0_i32 = arith.constant 0 : i32
    %c0_i32_0 = arith.constant 0 : i32
    %c0_i32_1 = arith.constant 0 : i32
    return %c0_i32, %c0_i32_0 : i32, i32
  }
  func.func @transform_3(%arg0: i32) -> (i32, i32) {
    %c0_i32 = arith.constant 0 : i32
    %c0_i32_0 = arith.constant 0 : i32
    %c0_i32_1 = arith.constant 0 : i32
    return %c0_i32, %c0_i32_0 : i32, i32
  }
  func.func @transform_4(%arg0: i32) -> (i32, i32) {
    %c0_i32 = arith.constant 0 : i32
    %c0_i32_0 = arith.constant 0 : i32
    %c0_i32_1 = arith.constant 0 : i32
    return %c0_i32, %c0_i32_0 : i32, i32
  }
  func.func @transform_5(%arg0: i32) -> (i32, i32) {
    %c0_i32 = arith.constant 0 : i32
    %c0_i32_0 = arith.constant 0 : i32
    %c0_i32_1 = arith.constant 0 : i32
    return %c0_i32, %c0_i32_0 : i32, i32
  }
  func.func @transform_6(%arg0: i32) -> (i32, i32) {
    %c0_i32 = arith.constant 0 : i32
    %c0_i32_0 = arith.constant 0 : i32
    %c0_i32_1 = arith.constant 0 : i32
    return %c0_i32, %c0_i32_0 : i32, i32
  }
  func.func @transform_7(%arg0: i32) -> (i32, i32) {
    %c0_i32 = arith.constant 0 : i32
    %c0_i32_0 = arith.constant 0 : i32
    return %arg0, %c0_i32 : i32, i32
  }
}

</mosaic_0001>

<llo_original>
// kernel: tpu_custom_call.1
$region0: #{tpu_custom_call.1}
  #allocation0 [shape = 'u32[]', space=smem, size = 0x4, offset = 0x4, fixed_abs, tag = 'smem constant byte address 0x4 - core index']
  #allocation1 [shape = 'u32[144,128]{1,0:T(1,128)}', space=vmem, size = 0x12000, scoped, tag = 'internal scratch']
  #allocation2 [shape = 'f32[1,1]{1,0:T(1,128)S(1)}', space=vmem, size = 0x200, scoped, tag = 'scoped memory for tpu_custom_call.1']
  %s0 = inlined_call_operand.vmem [shape: f32[64,32], index: 0, kind: input, shape index: {}]
  %s1 = inlined_call_operand.vmem [shape: f32[32,256], index: 1, kind: input, shape index: {}]
  %s2 = inlined_call_operand.vmem [shape: f32[1,256], index: 2, kind: input, shape index: {}]
  %s3 = inlined_call_operand.hbm [shape: f32[128,128], index: 3, kind: input, shape index: {}]
  %s4 = inlined_call_operand.vmem [shape: f32[1,128], index: 4, kind: input, shape index: {}]
  %s5 = inlined_call_operand.vmem [shape: f32[1,128], index: 5, kind: input, shape index: {}]
  %s6 = inlined_call_operand.<no memory space> [shape: f32[1,1], index: 6, kind: input, shape index: {}]
  %s7 = inlined_call_operand.hbm [shape: f32[64,128], index: 7, kind: output, shape index: {}]
  %s8 = sld [smem:[#allocation0]]
  $region42: #{tpu_custom_call.1} parent=0
    _
  %s10 = ssub.s32 1, %s8
  %s11 = scalar_select 0, %s10, %s8
  %v12 = vstv %s6
  %13 = vst [vmem:[#allocation2] sm:$0x1] %v12
  $region1: #{tpu_custom_call.1} parent=0
    #allocation3 [shape = 'u8[65536]{0}', space=vmem, size = 0x10000, scoped, tag = 'input window, operand 3, single buffered']
    #allocation4 [shape = 's32[1]{0}', space=sflag, size = 0x4, scoped, tag = 'scoped memory for tpu_custom_call.1']
    #allocation5 [shape = 's32[1]{0}', space=sflag, size = 0x4, scoped, tag = 'scoped memory for tpu_custom_call.1']
    #allocation6 [shape = 'u8[32768]{0}', space=vmem, size = 0x8000, scoped, tag = 'output window, operand 0, single buffered']
    %14 = vsyncpa [#allocation4], 0
    %15 = vsyncpa [#allocation5], 0
    // Predicated region
    $region2: #{tpu_custom_call.1} parent=1 // pred_check
      _
    $region3: #{tpu_custom_call.1} parent=1 // pred_check_branch
      %17 = sbr.rel (0) target = $region5
    $region4: #{tpu_custom_call.1} parent=1 // pred_region
      _
    $region5: #{tpu_custom_call.1} parent=1 // pred_fallthru
      _
    // Predicated region
    $region6: #{tpu_custom_call.1} parent=1 // pred_check
      _
    $region7: #{tpu_custom_call.1} parent=1 // pred_check_branch
      %19 = sbr.rel (0) target = $region9
    $region8: #{tpu_custom_call.1} parent=1 // pred_region
      _
    $region9: #{tpu_custom_call.1} parent=1 // pred_fallthru
      _
    // Predicated region
    $region10: #{tpu_custom_call.1} parent=1 // pred_check
      _
    $region11: #{tpu_custom_call.1} parent=1 // pred_check_branch
      %21 = sbr.rel (0) target = $region13
    $region12: #{tpu_custom_call.1} parent=1 // pred_region
      _
    $region13: #{tpu_custom_call.1} parent=1 // pred_fallthru
      _
    // Predicated region
    $region14: #{tpu_custom_call.1} parent=1 // pred_check
      _
    $region15: #{tpu_custom_call.1} parent=1 // pred_check_branch
      %23 = sbr.rel (0) target = $region17
    $region16: #{tpu_custom_call.1} parent=1 // pred_region
      %s25 = ssub.s32 2048, 2048
      %26 = vsyncadd [#allocation4], %s25
      %s27 = sshll.u32 [#allocation3], 4
      %s28 = int_to_ptr.vmem [resolvable:$true] %s27
      %33 = dma.hbm_to_vmem [thread:$0]  %s3, 2048, %s28, [#allocation4], 128, 128, 8
    $region17: #{tpu_custom_call.1} parent=1 // pred_fallthru
      _
    // Predicated region
    $region18: #{tpu_custom_call.1} parent=1 // pred_check
      _
    $region19: #{tpu_custom_call.1} parent=1 // pred_check_branch
      %35 = sbr.rel (0) target = $region21
    $region20: #{tpu_custom_call.1} parent=1 // pred_region
      _
    $region21: #{tpu_custom_call.1} parent=1 // pred_fallthru
      _
    // Predicated region
    $region22: #{tpu_custom_call.1} parent=1 // pred_check
      _
    $region23: #{tpu_custom_call.1} parent=1 // pred_check_branch
      %37 = sbr.rel (0) target = $region25
    $region24: #{tpu_custom_call.1} parent=1 // pred_region
      _
    $region25: #{tpu_custom_call.1} parent=1 // pred_fallthru
      _
    // Predicated region
    $region26: #{tpu_custom_call.1} parent=1 // pred_check
      _
    $region27: #{tpu_custom_call.1} parent=1 // pred_check_branch
      %39 = sbr.rel (0) target = $region29
    $region28: #{tpu_custom_call.1} parent=1 // pred_region
      _
    $region29: #{tpu_custom_call.1} parent=1 // pred_fallthru
      _
    // Predicated region
    $region30: #{tpu_custom_call.1} parent=1 // pred_check
      _
    $region31: #{tpu_custom_call.1} parent=1 // pred_check_branch
      %41 = sbr.rel (0) target = $region33
    $region32: #{tpu_custom_call.1} parent=1 // pred_region
      %42 = dma.done [#allocation4], 2048
    $region33: #{tpu_custom_call.1} parent=1 // pred_fallthru
      _
    %v43 = vld [vmem:[%s0] sm:$0xff]
    %v44 = vld [vmem:[%s0 + $0x8] sm:$0xff]
    %v45 = vld [vmem:[%s0 + $0x10] sm:$0xff]
    %v46 = vld [vmem:[%s0 + $0x18] sm:$0xff]
    %v47 = vld [vmem:[%s0 + $0x20] sm:$0xff]
    %v48 = vld [vmem:[%s0 + $0x28] sm:$0xff]
    %v49 = vld [vmem:[%s0 + $0x30] sm:$0xff]
    %v50 = vld [vmem:[%s0 + $0x38] sm:$0xff]
    %v51 = vld [vmem:[%s1] sm:$0xff]
    %v52 = vld [vmem:[%s1 + $0x8] sm:$0xff]
    %v53 = vld [vmem:[%s1 + $0x10] sm:$0xff]
    %v54 = vld [vmem:[%s1 + $0x18] sm:$0xff]
    %v55 = vld [vmem:[%s1 + $0x20] sm:$0xff]
    %v56 = vld [vmem:[%s1 + $0x28] sm:$0xff]
    %v57 = vld [vmem:[%s1 + $0x30] sm:$0xff]
    %v58 = vld [vmem:[%s1 + $0x38] sm:$0xff]
    %v59 = vld [vmem:[%s2] sm:$0x3]
    %v61 = vlaneseq
    %v62 = vshrl.u32 %v61, 7
    %v63 = vsub.s32 0, %v62
    %v64 = vrot.slane %v59, %v63
    %v65 = vlaneseq
    %v66 = vshrl.u32 %v65, 7
    %v67 = vsub.s32 1, %v66
    %v68 = vrot.slane %v59, %v67
    %vm71 = vcmask 261120
    %v73 = vsel %vm71, %v43, 0
    %v76 = vsel %vm71, %v44, 0
    %v79 = vsel %vm71, %v45, 0
    %v82 = vsel %vm71, %v46, 0
    %v85 = vsel %vm71, %v47, 0
    %v88 = vsel %vm71, %v48, 0
    %v91 = vsel %vm71, %v49, 0
    %v94 = vsel %vm71, %v50, 0
    %96 = vmatprep.subr.mxu0 0.0
    %97 = vmatpush1.msra.mxu0 0.0
    %98 = vmatprep.subr.mxu0 0.0
    %99 = vmatpush1.msra.mxu0 0.0
    %100 = vmatprep.subr.mxu0 0.0
    %101 = vmatpush1.msra.mxu0 0.0
    %102 = vmatprep.subr.mxu0 0.0
    %103 = vmatpush1.msra.mxu0 0.0
    %104 = vmatprep.subr.mxu0 0.0
    %105 = vmatpush1.msra.mxu0 0.0
    %106 = vmatprep.subr.mxu0 0.0
    %107 = vmatpush1.msra.mxu0 0.0
    %108 = vmatprep.subr.mxu0 0.0
    %109 = vmatpush1.msra.mxu0 0.0
    %110 = vmatprep.subr.mxu0 0.0
    %111 = vmatpush1.msra.mxu0 0.0
    %112 = vmatprep.subr.mxu0 0.0
    %113 = vmatpush1.msra.mxu0 0.0
    %114 = vmatprep.subr.mxu0 0.0
    %115 = vmatpush1.msra.mxu0 0.0
    %116 = vmatprep.subr.mxu0 0.0
    %117 = vmatpush1.msra.mxu0 0.0
    %118 = vmatprep.subr.mxu0 0.0
    %119 = vmatpush1.msra.mxu0 0.0
    %120 = vmatprep.subr.mxu0 %v58
    %121 = vmatpush1.msra.mxu0 %v57
    %122 = vmatprep.subr.mxu0 %v56
    %123 = vmatpush1.msra.mxu0 %v55
    %124 = vmatprep.subr.mxu0 %v54
    %125 = vmatpush1.msra.mxu0 %v53
    %126 = vmatprep.subr.mxu0 %v52
    %127 = vmatpush1.msra.mxu0 %v51
    %128 = vmatprep.subr.mxu0 0.0
    %129 = vmatpush2.msra.mxu0 0.0
    %130 = vmatprep.subr.mxu0 0.0
    %131 = vmatpush2.msra.mxu0 0.0
    %132 = vmatprep.subr.mxu0 0.0
    %133 = vmatpush2.msra.mxu0 0.0
    %134 = vmatprep.subr.mxu0 0.0
    %135 = vmatpush2.msra.mxu0 0.0
    %136 = vmatprep.subr.mxu0 0.0
    %137 = vmatpush2.msra.mxu0 0.0
    %138 = vmatprep.subr.mxu0 0.0
    %139 = vmatpush2.msra.mxu0 0.0
    %140 = vmatprep.subr.mxu0 0.0
    %141 = vmatpush2.msra.mxu0 0.0
    %142 = vmatprep.subr.mxu0 0.0
    %143 = vmatpush2.msra.mxu0 0.0
    %144 = vmatprep.subr.mxu0 0.0
    %145 = vmatpush2.msra.mxu0 0.0
    %146 = vmatprep.subr.mxu0 0.0
    %147 = vmatpush2.msra.mxu0 0.0
    %148 = vmatprep.subr.mxu0 0.0
    %149 = vmatpush2.msra.mxu0 0.0
    %150 = vmatprep.subr.mxu0 0.0
    %151 = vmatpush2.msra.mxu0 0.0
    %152 = vmatprep.subr.mxu0 0.0
    %153 = vmatpush2.msra.mxu0 0.0
    %154 = vmatprep.subr.mxu0 0.0
    %155 = vmatpush2.msra.mxu0 0.0
    %156 = vmatprep.subr.mxu0 0.0
    %157 = vmatpush2.msra.mxu0 0.0
    %158 = vmatprep.subr.mxu0 0.0
    %159 = vmatpush2.msra.mxu0 0.0
    %160 = vmatprep.mubr.f32.mxu0 0.0
    %161 = vmatmul.mubr.f32.gmra.mxu0 %v73
    %v162 = vpop.f32.mrf.mxu0
    %v163 = vadd.f32 %v64, %v162
    %v164 = vpop.f32.mrf.mxu0
    %v165 = vadd.f32 %v68, %v164
    %166 = vmatprep.mubr.f32.mxu0 0.0
    %167 = vmatmul.mubr.f32.gmra.mxu0 %v76
    %v168 = vpop.f32.mrf.mxu0
    %v169 = vadd.f32 %v64, %v168
    %v170 = vpop.f32.mrf.mxu0
    %v171 = vadd.f32 %v68, %v170
    %172 = vmatprep.mubr.f32.mxu0 0.0
    %173 = vmatmul.mubr.f32.gmra.mxu0 %v79
    %v174 = vpop.f32.mrf.mxu0
    %v175 = vadd.f32 %v64, %v174
    %v176 = vpop.f32.mrf.mxu0
    %v177 = vadd.f32 %v68, %v176
    %178 = vmatprep.mubr.f32.mxu0 0.0
    %179 = vmatmul.mubr.f32.gmra.mxu0 %v82
    %v180 = vpop.f32.mrf.mxu0
    %v181 = vadd.f32 %v64, %v180
    %v182 = vpop.f32.mrf.mxu0
    %v183 = vadd.f32 %v68, %v182
    %184 = vmatprep.mubr.f32.mxu0 0.0
    %185 = vmatmul.mubr.f32.gmra.mxu0 %v85
    %v186 = vpop.f32.mrf.mxu0
    %v187 = vadd.f32 %v64, %v186
    %v188 = vpop.f32.mrf.mxu0
    %v189 = vadd.f32 %v68, %v188
    %190 = vmatprep.mubr.f32.mxu0 0.0
    %191 = vmatmul.mubr.f32.gmra.mxu0 %v88
    %v192 = vpop.f32.mrf.mxu0
    %v193 = vadd.f32 %v64, %v192
    %v194 = vpop.f32.mrf.mxu0
    %v195 = vadd.f32 %v68, %v194
    %196 = vmatprep.mubr.f32.mxu0 0.0
    %197 = vmatmul.mubr.f32.gmra.mxu0 %v91
    %v198 = vpop.f32.mrf.mxu0
    %v199 = vadd.f32 %v64, %v198
    %v200 = vpop.f32.mrf.mxu0
    %v201 = vadd.f32 %v68, %v200
    %202 = vmatprep.mubr.f32.mxu0 0.0
    %203 = vmatmul.mubr.f32.gmra.mxu0 %v94
    %v204 = vpop.f32.mrf.mxu0
    %v205 = vadd.f32 %v64, %v204
    %v206 = vpop.f32.mrf.mxu0
    %v207 = vadd.f32 %v68, %v206
    %208 = vdwg.mxu0
    %v209 = vmax.f32 %v163, 0.0
    %v210 = vmax.f32 %v165, 0.0
    %v211 = vmax.f32 %v169, 0.0
    %v212 = vmax.f32 %v171, 0.0
    %v213 = vmax.f32 %v175, 0.0
    %v214 = vmax.f32 %v177, 0.0
    %v215 = vmax.f32 %v181, 0.0
    %v216 = vmax.f32 %v183, 0.0
    %v217 = vmax.f32 %v187, 0.0
    %v218 = vmax.f32 %v189, 0.0
    %v219 = vmax.f32 %v193, 0.0
    %v220 = vmax.f32 %v195, 0.0
    %v221 = vmax.f32 %v199, 0.0
    %v222 = vmax.f32 %v201, 0.0
    %v223 = vmax.f32 %v205, 0.0
    %v224 = vmax.f32 %v207, 0.0
    %v225 = vld [vmem:[#allocation3] sm:$0xff]
    %v226 = vld [vmem:[#allocation3 + $0x8] sm:$0xff]
    %v227 = vld [vmem:[#allocation3 + $0x10] sm:$0xff]
    %v228 = vld [vmem:[#allocation3 + $0x18] sm:$0xff]
    %v229 = vld [vmem:[#allocation3 + $0x20] sm:$0xff]
    %v230 = vld [vmem:[#allocation3 + $0x28] sm:$0xff]
    %v231 = vld [vmem:[#allocation3 + $0x30] sm:$0xff]
    %v232 = vld [vmem:[#allocation3 + $0x38] sm:$0xff]
    %v233 = vld [vmem:[#allocation3 + $0x40] sm:$0xff]
    %v234 = vld [vmem:[#allocation3 + $0x48] sm:$0xff]
    %v235 = vld [vmem:[#allocation3 + $0x50] sm:$0xff]
    %v236 = vld [vmem:[#allocation3 + $0x58] sm:$0xff]
    %v237 = vld [vmem:[#allocation3 + $0x60] sm:$0xff]
    %v238 = vld [vmem:[#allocation3 + $0x68] sm:$0xff]
    %v239 = vld [vmem:[#allocation3 + $0x70] sm:$0xff]
    %v240 = vld [vmem:[#allocation3 + $0x78] sm:$0xff]
    %v241 = vld [vmem:[%s4] sm:$0x1]
    %v243 = vlaneseq
    %v244 = vshrl.u32 %v243, 7
    %v245 = vsub.s32 0, %v244
    %v246 = vrot.slane %v241, %v245
    %248 = vmatprep.subr.mxu0 0.0
    %249 = vmatpush1.msra.mxu0 %v240
    %250 = vmatprep.subr.mxu0 0.0
    %251 = vmatpush1.msra.mxu0 %v239
    %252 = vmatprep.subr.mxu0 0.0
    %253 = vmatpush1.msra.mxu0 %v238
    %254 = vmatprep.subr.mxu0 0.0
    %255 = vmatpush1.msra.mxu0 %v237
    %256 = vmatprep.subr.mxu0 0.0
    %257 = vmatpush1.msra.mxu0 %v236
    %258 = vmatprep.subr.mxu0 0.0
    %259 = vmatpush1.msra.mxu0 %v235
    %260 = vmatprep.subr.mxu0 0.0
    %261 = vmatpush1.msra.mxu0 %v234
    %262 = vmatprep.subr.mxu0 0.0
    %263 = vmatpush1.msra.mxu0 %v233
    %264 = vmatprep.subr.mxu0 0.0
    %265 = vmatpush1.msra.mxu0 %v232
    %266 = vmatprep.subr.mxu0 0.0
    %267 = vmatpush1.msra.mxu0 %v231
    %268 = vmatprep.subr.mxu0 0.0
    %269 = vmatpush1.msra.mxu0 %v230
    %270 = vmatprep.subr.mxu0 0.0
    %271 = vmatpush1.msra.mxu0 %v229
    %272 = vmatprep.subr.mxu0 0.0
    %273 = vmatpush1.msra.mxu0 %v228
    %274 = vmatprep.subr.mxu0 0.0
    %275 = vmatpush1.msra.mxu0 %v227
    %276 = vmatprep.subr.mxu0 0.0
    %277 = vmatpush1.msra.mxu0 %v226
    %278 = vmatprep.subr.mxu0 0.0
    %279 = vmatpush1.msra.mxu0 %v225
    %280 = vmatprep.subr.mxu0 0.0
    %281 = vmatpush2.msra.mxu0 0.0
    %282 = vmatprep.subr.mxu0 0.0
    %283 = vmatpush2.msra.mxu0 0.0
    %284 = vmatprep.subr.mxu0 0.0
    %285 = vmatpush2.msra.mxu0 0.0
    %286 = vmatprep.subr.mxu0 0.0
    %287 = vmatpush2.msra.mxu0 0.0
    %288 = vmatprep.subr.mxu0 0.0
    %289 = vmatpush2.msra.mxu0 0.0
    %290 = vmatprep.subr.mxu0 0.0
    %291 = vmatpush2.msra.mxu0 0.0
    %292 = vmatprep.subr.mxu0 0.0
    %293 = vmatpush2.msra.mxu0 0.0
    %294 = vmatprep.subr.mxu0 0.0
    %295 = vmatpush2.msra.mxu0 0.0
    %296 = vmatprep.subr.mxu0 0.0
    %297 = vmatpush2.msra.mxu0 0.0
    %298 = vmatprep.subr.mxu0 0.0
    %299 = vmatpush2.msra.mxu0 0.0
    %300 = vmatprep.subr.mxu0 0.0
    %301 = vmatpush2.msra.mxu0 0.0
    %302 = vmatprep.subr.mxu0 0.0
    %303 = vmatpush2.msra.mxu0 0.0
    %304 = vmatprep.subr.mxu0 0.0
    %305 = vmatpush2.msra.mxu0 0.0
    %306 = vmatprep.subr.mxu0 0.0
    %307 = vmatpush2.msra.mxu0 0.0
    %308 = vmatprep.subr.mxu0 0.0
    %309 = vmatpush2.msra.mxu0 0.0
    %310 = vmatprep.subr.mxu0 0.0
    %311 = vmatpush2.msra.mxu0 0.0
    %312 = vmatprep.mubr.f32.mxu0 0.0
    %313 = vmatmul.mubr.f32.gmra.mxu0 %v209
    %v314 = vpop.f32.mrf.mxu0
    %v315 = vadd.f32 %v246, %v314
    %v316 = vpop.f32.mrf.mxu0
    %317 = vmatprep.mubr.f32.mxu0 0.0
    %318 = vmatmul.mubr.f32.gmra.mxu0 %v211
    %v319 = vpop.f32.mrf.mxu0
    %v320 = vadd.f32 %v246, %v319
    %v321 = vpop.f32.mrf.mxu0
    %322 = vmatprep.mubr.f32.mxu0 0.0
    %323 = vmatmul.mubr.f32.gmra.mxu0 %v213
    %v324 = vpop.f32.mrf.mxu0
    %v325 = vadd.f32 %v246, %v324
    %v326 = vpop.f32.mrf.mxu0
    %327 = vmatprep.mubr.f32.mxu0 0.0
    %328 = vmatmul.mubr.f32.gmra.mxu0 %v215
    %v329 = vpop.f32.mrf.mxu0
    %v330 = vadd.f32 %v246, %v329
    %v331 = vpop.f32.mrf.mxu0
    %332 = vmatprep.mubr.f32.mxu0 0.0
    %333 = vmatmul.mubr.f32.gmra.mxu0 %v217
    %v334 = vpop.f32.mrf.mxu0
    %v335 = vadd.f32 %v246, %v334
    %v336 = vpop.f32.mrf.mxu0
    %337 = vmatprep.mubr.f32.mxu0 0.0
    %338 = vmatmul.mubr.f32.gmra.mxu0 %v219
    %v339 = vpop.f32.mrf.mxu0
    %v340 = vadd.f32 %v246, %v339
    %v341 = vpop.f32.mrf.mxu0
    %342 = vmatprep.mubr.f32.mxu0 0.0
    %343 = vmatmul.mubr.f32.gmra.mxu0 %v221
    %v344 = vpop.f32.mrf.mxu0
    %v345 = vadd.f32 %v246, %v344
    %v346 = vpop.f32.mrf.mxu0
    %347 = vmatprep.mubr.f32.mxu0 0.0
    %348 = vmatmul.mubr.f32.gmra.mxu0 %v223
    %v349 = vpop.f32.mrf.mxu0
    %v350 = vadd.f32 %v246, %v349
    %v351 = vpop.f32.mrf.mxu0
    %352 = vdwg.mxu0
    %v353 = vld [vmem:[%s5] sm:$0x1]
    %v355 = vlaneseq
    %v356 = vshrl.u32 %v355, 7
    %v357 = vsub.s32 0, %v356
    %v358 = vrot.slane %v353, %v357
    %v360 = vmul.f32 %v210, %v358
    %v361 = vmul.f32 %v212, %v358
    %v362 = vmul.f32 %v214, %v358
    %v363 = vmul.f32 %v216, %v358
    %v364 = vmul.f32 %v218, %v358
    %v365 = vmul.f32 %v220, %v358
    %v366 = vmul.f32 %v222, %v358
    %v367 = vmul.f32 %v224, %v358
    %368 = vadd.xlane.f32.xlu0 %v360
    %v369 = vpop.xlane.xlu0 %368
    %370 = vadd.xlane.f32.xlu0 %v361
    %v371 = vpop.xlane.xlu0 %370
    %372 = vadd.xlane.f32.xlu0 %v362
    %v373 = vpop.xlane.xlu0 %372
    %374 = vadd.xlane.f32.xlu0 %v363
    %v375 = vpop.xlane.xlu0 %374
    %376 = vadd.xlane.f32.xlu0 %v364
    %v377 = vpop.xlane.xlu0 %376
    %378 = vadd.xlane.f32.xlu0 %v365
    %v379 = vpop.xlane.xlu0 %378
    %380 = vadd.xlane.f32.xlu0 %v366
    %v381 = vpop.xlane.xlu0 %380
    %382 = vadd.xlane.f32.xlu0 %v367
    %v383 = vpop.xlane.xlu0 %382
    %v384 = vld [vmem:[#allocation2] sm:$0x1]
    %v386 = vlaneseq
    %v387 = vshrl.u32 %v386, 7
    %v388 = vsub.s32 0, %v387
    %v389 = vrot.slane %v384, %v388
    %v391 = vadd.f32 %v369, %v389
    %v392 = vadd.f32 %v371, %v389
    %v393 = vadd.f32 %v373, %v389
    %v394 = vadd.f32 %v375, %v389
    %v395 = vadd.f32 %v377, %v389
    %v396 = vadd.f32 %v379, %v389
    %v397 = vadd.f32 %v381, %v389
    %v398 = vadd.f32 %v383, %v389
    %399 = vadd.xlane.f32.xlu0 %v315
    %v400 = vpop.xlane.xlu0 %399
    %401 = vadd.xlane.f32.xlu0 %v320
    %v402 = vpop.xlane.xlu0 %401
    %403 = vadd.xlane.f32.xlu0 %v325
    %v404 = vpop.xlane.xlu0 %403
    %405 = vadd.xlane.f32.xlu0 %v330
    %v406 = vpop.xlane.xlu0 %405
    %407 = vadd.xlane.f32.xlu0 %v335
    %v408 = vpop.xlane.xlu0 %407
    %409 = vadd.xlane.f32.xlu0 %v340
    %v410 = vpop.xlane.xlu0 %409
    %411 = vadd.xlane.f32.xlu0 %v345
    %v412 = vpop.xlane.xlu0 %411
    %413 = vadd.xlane.f32.xlu0 %v350
    %v414 = vpop.xlane.xlu0 %413
    %v415 = vmul.f32 %v400, 0.125
    %v416 = vmul.f32 %v402, 0.125
    %v417 = vmul.f32 %v404, 0.125
    %v418 = vmul.f32 %v406, 0.125
    %v419 = vmul.f32 %v408, 0.125
    %v420 = vmul.f32 %v410, 0.125
    %v421 = vmul.f32 %v412, 0.125
    %v422 = vmul.f32 %v414, 0.125
    %424 = vset.pattern.permute.xlu0 0
    %425 = vperm.xlu0 %424, %v391
    %v426 = vpop.permute.xlu0 %425
    %429 = vset.pattern.permute.xlu0 0
    %430 = vperm.xlu0 %429, %v392
    %v431 = vpop.permute.xlu0 %430
    %434 = vset.pattern.permute.xlu0 0
    %435 = vperm.xlu0 %434, %v393
    %v436 = vpop.permute.xlu0 %435
    %439 = vset.pattern.permute.xlu0 0
    %440 = vperm.xlu0 %439, %v394
    %v441 = vpop.permute.xlu0 %440
    %444 = vset.pattern.permute.xlu0 0
    %445 = vperm.xlu0 %444, %v395
    %v446 = vpop.permute.xlu0 %445
    %449 = vset.pattern.permute.xlu0 0
    %450 = vperm.xlu0 %449, %v396
    %v451 = vpop.permute.xlu0 %450
    %454 = vset.pattern.permute.xlu0 0
    %455 = vperm.xlu0 %454, %v397
    %v456 = vpop.permute.xlu0 %455
    %459 = vset.pattern.permute.xlu0 0
    %460 = vperm.xlu0 %459, %v398
    %v461 = vpop.permute.xlu0 %460
    %v463 = vadd.f32 %v426, %v315
    %v464 = vadd.f32 %v431, %v320
    %v465 = vadd.f32 %v436, %v325
    %v466 = vadd.f32 %v441, %v330
    %v467 = vadd.f32 %v446, %v335
    %v468 = vadd.f32 %v451, %v340
    %v469 = vadd.f32 %v456, %v345
    %v470 = vadd.f32 %v461, %v350
    %v471 = vsub.f32 %v463, %v415
    %v472 = vsub.f32 %v464, %v416
    %v473 = vsub.f32 %v465, %v417
    %v474 = vsub.f32 %v466, %v418
    %v475 = vsub.f32 %v467, %v419
    %v476 = vsub.f32 %v468, %v420
    %v477 = vsub.f32 %v469, %v421
    %v478 = vsub.f32 %v470, %v422
    %479 = vst [vmem:[#allocation6] sm:$0xff] %v471
    %480 = vst [vmem:[#allocation6 + $0x8] sm:$0xff] %v472
    %481 = vst [vmem:[#allocation6 + $0x10] sm:$0xff] %v473
    %482 = vst [vmem:[#allocation6 + $0x18] sm:$0xff] %v474
    %483 = vst [vmem:[#allocation6 + $0x20] sm:$0xff] %v475
    %484 = vst [vmem:[#allocation6 + $0x28] sm:$0xff] %v476
    %485 = vst [vmem:[#allocation6 + $0x30] sm:$0xff] %v477
    %486 = vst [vmem:[#allocation6 + $0x38] sm:$0xff] %v478
    // Predicated region
    $region34: #{tpu_custom_call.1} parent=1 // pred_check
      _
    $region35: #{tpu_custom_call.1} parent=1 // pred_check_branch
      %488 = sbr.rel (0) target = $region37
    $region36: #{tpu_custom_call.1} parent=1 // pred_region
      %s490 = ssub.s32 1024, 1024
      %491 = vsyncadd [#allocation5], %s490
      %s492 = sshll.u32 [#allocation6], 4
      %s493 = int_to_ptr.vmem [resolvable:$true] %s492
      %498 = dma.vmem_to_hbm [thread:$0]  %s493, 1024, %s7, [#allocation5], 128, 128, 8
    $region37: #{tpu_custom_call.1} parent=1 // pred_fallthru
      _
    // Predicated region
    $region38: #{tpu_custom_call.1} parent=1 // pred_check
      _
    $region39: #{tpu_custom_call.1} parent=1 // pred_check_branch
      %500 = sbr.rel (0) target = $region41
    $region40: #{tpu_custom_call.1} parent=1 // pred_region
      %501 = dma.done [#allocation5], 1024
    $region41: #{tpu_custom_call.1} parent=1 // pred_fallthru
      _
    %502 = vsyncpa [#allocation4], 1
    %503 = vsyncpa [#allocation5], 1

</llo_original>
